<compile_context>
chip_gen: v6e
topology: v6e:2x2x1
jax: 0.10.0
libtpu: 0.0.40
codegen_flags: <defaults>
</compile_context>

<pallas_src>
import functools

import jax
import jax.numpy as jnp
from jax.experimental import pallas as pl
from jax.experimental.pallas import tpu as pltpu


def _round_up(a, m):
    return ((a + m - 1) // m) * m


def linear_softmax_kernel(x_ref, w_ref, o_ref, *, d_out):
    # x_ref: (TB, K) f32  |  w_ref: (d_pad, K) f32  |  o_ref: (d_out, TB) f32
    # logits[f, b] = sum_k w[f, k] * x[b, k]  ->  (d_pad, TB), batch on the lane axis.
    logits = jax.lax.dot_general(
        w_ref[...],
        x_ref[...],
        dimension_numbers=(((1,), (1,)), ((), ())),
        precision=jax.lax.Precision.HIGHEST,
        preferred_element_type=jnp.float32,
    )
    # Drop the zero-padded weight rows (static sublane slice) so they never
    # enter the softmax reduction.
    logits = logits[:d_out, :]

    # Numerically-stable softmax along the feature (sublane) axis == torch dim=1.
    m = jnp.max(logits, axis=0, keepdims=True)
    e = jnp.exp(logits - m)
    denom = jnp.sum(e, axis=0, keepdims=True)
    o_ref[...] = (e / denom).astype(o_ref.dtype)  # exact normalization (DMA-bound => free)


def network_forward(x, w, *, tb=1024):
    """x: (B, 300) f32, w: (4, 300) f32 (PyTorch nn.Linear weight layout, bias=False)."""
    B, K = x.shape
    d_out, k_w = w.shape
    assert K == k_w, "weight / input feature-dim mismatch"

    SUB, LANE = 8, 128

    # Pad only the tiny weight: 4 -> 8 sublanes.  No padding of x, no K padding.
    d_pad = _round_up(max(d_out, SUB), SUB)
    w_p = jnp.pad(w, ((0, d_pad - d_out), (0, 0)))

    # Batch tile (lane axis of the transposed output): multiple of 128, capped so the
    # grid has >= 2 steps when B allows it (v7x dual-TC split of the "parallel" axis).
    if B <= LANE:
        TB = B  # single exact block (block dims equal to full array dims are legal)
    else:
        TB = min(_round_up(tb, LANE), max(LANE, _round_up(pl.cdiv(B, 2), LANE)))
    grid = pl.cdiv(B, TB)

    kernel = functools.partial(linear_softmax_kernel, d_out=d_out)

    out_t = pl.pallas_call(
        kernel,
        out_shape=jax.ShapeDtypeStruct((d_out, B), jnp.float32),
        grid_spec=pltpu.PrefetchScalarGridSpec(
            num_scalar_prefetch=0,
            grid=(grid,),
            in_specs=[
                # x tile, pipelined over the batch; last block may be ragged
                # (garbage rows only affect masked-out output lanes).
                pl.BlockSpec((TB, K), lambda i: (i, 0)),
                # weight, resident in VMEM (constant block index => no re-DMA).
                pl.BlockSpec((d_pad, K), lambda i: (0, 0)),
            ],
            out_specs=pl.BlockSpec((d_out, TB), lambda i: (0, i)),
        ),
        compiler_params=pltpu.CompilerParams(
            dimension_semantics=("parallel",),
        ),
    )(x, w_p)

    # Cheap (4, B) -> (B, 4) transpose; no padded-buffer slice pass.
    return out_t.T


if __name__ == "__main__":
    key = jax.random.PRNGKey(0)
    k_x, k_w, k_x2 = jax.random.split(key, 3)

    B, D_in, D_out = 8, 300, 4

    # Deterministic init mimicking nn.Linear's uniform(-1/sqrt(fan_in), 1/sqrt(fan_in)).
    bound = 1.0 / (D_in ** 0.5)
    w = jax.random.uniform(k_w, (D_out, D_in), jnp.float32, -bound, bound)
    x = jax.random.normal(k_x, (B, D_in), jnp.float32)

    out = jax.block_until_ready(network_forward(x, w))
    ref = jax.nn.softmax(jnp.dot(x, w.T, precision="highest"), axis=1)
    assert out.shape == (B, D_out)
    assert jnp.allclose(out, ref, atol=1e-4, rtol=1e-4)
    assert jnp.allclose(jnp.sum(out, axis=1), 1.0, atol=1e-4)

    # Second check: multi-step grid with a ragged last batch block (300 = 2*128 + 44).
    B2 = 300
    x2 = jax.random.normal(k_x2, (B2, D_in), jnp.float32)
    out2 = jax.block_until_ready(network_forward(x2, w, tb=128))
    ref2 = jax.nn.softmax(jnp.dot(x2, w.T, precision="highest"), axis=1)
    assert out2.shape == (B2, D_out)
    assert jnp.allclose(out2, ref2, atol=1e-4, rtol=1e-4)

    print("KERNEL_OK")
</pallas_src>

<mosaic_0001>
module attributes {stable_mosaic.version = 11 : i64} {
  func.func @linear_softmax_kernel(%arg0: i32, %arg1: memref<8x300xf32, #tpu.memory_space<vmem>>, %arg2: memref<8x300xf32, #tpu.memory_space<vmem>>, %arg3: memref<4x8xf32, #tpu.memory_space<vmem>>) attributes {dimension_semantics = [#tpu.dimension_semantics<parallel>], iteration_bounds = array<i64: 1>, scalar_prefetch = 0 : i64, scratch_operands = 0 : i64, tpu.core_type = #tpu.core_type<tc>, window_params = [{transform_indices = @transform_0, window_bounds = array<i64: 8, 300>}, {pipeline_mode = #tpu.pipeline_mode<synchronous>, transform_indices = @transform_1, window_bounds = array<i64: 8, 300>}, {transform_indices = @transform_2, window_bounds = array<i64: 4, 8>}]} {
    %c0 = arith.constant 0 : index
    %c0_0 = arith.constant 0 : index
    %0 = vector.load %arg2[%c0, %c0_0] : memref<8x300xf32, #tpu.memory_space<vmem>>, vector<8x300xf32>
    %c0_1 = arith.constant 0 : index
    %c0_2 = arith.constant 0 : index
    %1 = vector.load %arg1[%c0_1, %c0_2] : memref<8x300xf32, #tpu.memory_space<vmem>>, vector<8x300xf32>
    %cst = arith.constant dense<0.000000e+00> : vector<8x8xf32>
    %2 = tpu.matmul %0, %1, %cst {dimension_numbers = #tpu.dot_dimension_numbers<[1], [1], [0], [0], [0, 0, 1, 0], [], []>, precision = #tpu.contract_precision<fp32>} : vector<8x300xf32>, vector<8x300xf32>, vector<8x8xf32> -> vector<8x8xf32>
    %3 = vector.extract_strided_slice %2 {offsets = [0, 0], sizes = [4, 8], strides = [1, 1]} : vector<8x8xf32> to vector<4x8xf32>
    %cst_3 = arith.constant dense<0xFF800000> : vector<8xf32>
    %4 = vector.multi_reduction <maximumf>, %3, %cst_3 [0] : vector<4x8xf32> to vector<8xf32>
    %5 = vector.shape_cast %4 : vector<8xf32> to vector<1x8xf32>
    %6 = vector.broadcast %5 : vector<1x8xf32> to vector<4x8xf32>
    %7 = arith.subf %3, %6 : vector<4x8xf32>
    %8 = math.exp %7 : vector<4x8xf32>
    %cst_4 = arith.constant dense<0.000000e+00> : vector<8xf32>
    %9 = vector.multi_reduction <add>, %8, %cst_4 [0] : vector<4x8xf32> to vector<8xf32>
    %10 = vector.shape_cast %9 : vector<8xf32> to vector<1x8xf32>
    %11 = vector.broadcast %10 : vector<1x8xf32> to vector<4x8xf32>
    %12 = arith.divf %8, %11 : vector<4x8xf32>
    %c0_5 = arith.constant 0 : index
    %c0_6 = arith.constant 0 : index
    %13 = vector.load %arg3[%c0_5, %c0_6] : memref<4x8xf32, #tpu.memory_space<vmem>>, vector<4x8xf32>
    tpu.vector_store %arg3[%c0_5, %c0_6], %12 {strides = array<i32>} : memref<4x8xf32, #tpu.memory_space<vmem>>, vector<4x8xf32>,
    return
  }
  func.func @transform_0(%arg0: i32) -> (i32, i32) {
    %c0_i32 = arith.constant 0 : i32
    %c0_i32_0 = arith.constant 0 : i32
    return %arg0, %c0_i32 : i32, i32
  }
  func.func @transform_1(%arg0: i32) -> (i32, i32) {
    %c0_i32 = arith.constant 0 : i32
    %c0_i32_0 = arith.constant 0 : i32
    %c0_i32_1 = arith.constant 0 : i32
    return %c0_i32, %c0_i32_0 : i32, i32
  }
  func.func @transform_2(%arg0: i32) -> (i32, i32) {
    %c0_i32 = arith.constant 0 : i32
    %c0_i32_0 = arith.constant 0 : i32
    return %c0_i32, %arg0 : i32, i32
  }
}

</mosaic_0001>

<llo_original>
// kernel: tpu_custom_call.1
$region0: #{tpu_custom_call.1}
  #allocation0 [shape = 'u32[]', space=smem, size = 0x4, offset = 0x4, fixed_abs, tag = 'smem constant byte address 0x4 - core index']
  #allocation1 [shape = 'u32[144,128]{1,0:T(1,128)}', space=vmem, size = 0x12000, scoped, tag = 'internal scratch']
  %s0 = inlined_call_operand.hbm [shape: f32[8,300], index: 0, kind: input, shape index: {}]
  %s1 = inlined_call_operand.hbm [shape: f32[8,300], index: 1, kind: input, shape index: {}]
  %s2 = inlined_call_operand.hbm [shape: f32[4,8], index: 2, kind: output, shape index: {}]
  %s3 = sld [smem:[#allocation0]]
  $region26: #{tpu_custom_call.1} parent=0
    _
  %s5 = ssub.s32 1, %s3
  %s6 = scalar_select 0, %s5, %s3
  $region1: #{tpu_custom_call.1} parent=0
    #allocation2 [shape = 'u8[12288]{0}', space=vmem, size = 0x3000, scoped, tag = 'input window, operand 0, single buffered']
    #allocation3 [shape = 's32[1]{0}', space=sflag, size = 0x4, scoped, tag = 'scoped memory for tpu_custom_call.1']
    #allocation4 [shape = 's32[1]{0}', space=sflag, size = 0x4, scoped, tag = 'scoped memory for tpu_custom_call.1']
    #allocation5 [shape = 'u8[12288]{0}', space=vmem, size = 0x3000, scoped, tag = 'input window, operand 1, single buffered']
    #allocation6 [shape = 's32[1]{0}', space=sflag, size = 0x4, scoped, tag = 'scoped memory for tpu_custom_call.1']
    #allocation7 [shape = 'u8[2048]{0}', space=vmem, size = 0x800, scoped, tag = 'output window, operand 0, single buffered']
    %7 = vsyncpa [#allocation3], 0
    %8 = vsyncpa [#allocation6], 0
    %9 = vsyncpa [#allocation4], 0
    // Predicated region
    $region2: #{tpu_custom_call.1} parent=1 // pred_check
      _
    $region3: #{tpu_custom_call.1} parent=1 // pred_check_branch
      %11 = sbr.rel (0) target = $region5
    $region4: #{tpu_custom_call.1} parent=1 // pred_region
      %s13 = ssub.s32 384, 384
      %14 = vsyncadd [#allocation3], %s13
      %s16 = sshll.u32 [#allocation2], 4
      %s17 = int_to_ptr.vmem [resolvable:$true] %s16
      %19 = dma.hbm_to_vmem [thread:$0]  %s0, 384, %s17, [#allocation3]
    $region5: #{tpu_custom_call.1} parent=1 // pred_fallthru
      _
    // Predicated region
    $region6: #{tpu_custom_call.1} parent=1 // pred_check
      _
    $region7: #{tpu_custom_call.1} parent=1 // pred_check_branch
      %21 = sbr.rel (0) target = $region9
    $region8: #{tpu_custom_call.1} parent=1 // pred_region
      %s23 = ssub.s32 384, 384
      %24 = vsyncadd [#allocation6], %s23
      %s26 = sshll.u32 [#allocation5], 4
      %s27 = int_to_ptr.vmem [resolvable:$true] %s26
      %29 = dma.hbm_to_vmem [thread:$0]  %s1, 384, %s27, [#allocation6]
    $region9: #{tpu_custom_call.1} parent=1 // pred_fallthru
      _
    // Predicated region
    $region10: #{tpu_custom_call.1} parent=1 // pred_check
      _
    $region11: #{tpu_custom_call.1} parent=1 // pred_check_branch
      %31 = sbr.rel (0) target = $region13
    $region12: #{tpu_custom_call.1} parent=1 // pred_region
      %32 = dma.done [#allocation3], 384
    $region13: #{tpu_custom_call.1} parent=1 // pred_fallthru
      _
    // Predicated region
    $region14: #{tpu_custom_call.1} parent=1 // pred_check
      _
    $region15: #{tpu_custom_call.1} parent=1 // pred_check_branch
      %34 = sbr.rel (0) target = $region17
    $region16: #{tpu_custom_call.1} parent=1 // pred_region
      %35 = dma.done [#allocation6], 384
    $region17: #{tpu_custom_call.1} parent=1 // pred_fallthru
      _
    %v36 = vld [vmem:[#allocation5] sm:$0xff]
    %v37 = vld [vmem:[#allocation5 + $0x8] sm:$0xff]
    %v38 = vld [vmem:[#allocation5 + $0x10] sm:$0xff]
    %v39 = vld [vmem:[#allocation2] sm:$0xff]
    %v40 = vld [vmem:[#allocation2 + $0x8] sm:$0xff]
    %v41 = vld [vmem:[#allocation2 + $0x10] sm:$0xff]
    %vm42 = vcmask 359424
    %v44 = vsel %vm42, %v38, 0
    %v47 = vsel %vm42, %v41, 0
    %49 = vmatprep.subr.mxu0 0.0
    %50 = vmatpush1.xpose.msra.mxu0 0.0
    %51 = vmatprep.subr.mxu0 0.0
    %52 = vmatpush1.xpose.msra.mxu0 0.0
    %53 = vmatprep.subr.mxu0 0.0
    %54 = vmatpush1.xpose.msra.mxu0 0.0
    %55 = vmatprep.subr.mxu0 0.0
    %56 = vmatpush1.xpose.msra.mxu0 0.0
    %57 = vmatprep.subr.mxu0 0.0
    %58 = vmatpush1.xpose.msra.mxu0 0.0
    %59 = vmatprep.subr.mxu0 0.0
    %60 = vmatpush1.xpose.msra.mxu0 0.0
    %61 = vmatprep.subr.mxu0 0.0
    %62 = vmatpush1.xpose.msra.mxu0 0.0
    %63 = vmatprep.subr.mxu0 0.0
    %64 = vmatpush1.xpose.msra.mxu0 0.0
    %65 = vmatprep.subr.mxu0 0.0
    %66 = vmatpush1.xpose.msra.mxu0 0.0
    %67 = vmatprep.subr.mxu0 0.0
    %68 = vmatpush1.xpose.msra.mxu0 0.0
    %69 = vmatprep.subr.mxu0 0.0
    %70 = vmatpush1.xpose.msra.mxu0 0.0
    %71 = vmatprep.subr.mxu0 0.0
    %72 = vmatpush1.xpose.msra.mxu0 0.0
    %73 = vmatprep.subr.mxu0 0.0
    %74 = vmatpush1.xpose.msra.mxu0 0.0
    %75 = vmatprep.subr.mxu0 0.0
    %76 = vmatpush1.xpose.msra.mxu0 0.0
    %77 = vmatprep.subr.mxu0 0.0
    %78 = vmatpush1.xpose.msra.mxu0 0.0
    %v79 = vand.u32 %v40, 4294901760
    %80 = vmatprep.subr.mxu0 %v79
    %v81 = vand.u32 %v39, 4294901760
    %82 = vmatpush1.xpose.msra.mxu0 %v81
    %83 = vmatprep.subr.mxu0 0.0
    %84 = vmatpush2.xpose.msra.mxu0 0.0
    %85 = vmatprep.subr.mxu0 0.0
    %86 = vmatpush2.xpose.msra.mxu0 0.0
    %87 = vmatprep.subr.mxu0 0.0
    %88 = vmatpush2.xpose.msra.mxu0 0.0
    %89 = vmatprep.subr.mxu0 0.0
    %90 = vmatpush2.xpose.msra.mxu0 0.0
    %91 = vmatprep.subr.mxu0 0.0
    %92 = vmatpush2.xpose.msra.mxu0 0.0
    %93 = vmatprep.subr.mxu0 0.0
    %94 = vmatpush2.xpose.msra.mxu0 0.0
    %95 = vmatprep.subr.mxu0 0.0
    %96 = vmatpush2.xpose.msra.mxu0 0.0
    %97 = vmatprep.subr.mxu0 0.0
    %98 = vmatpush2.xpose.msra.mxu0 0.0
    %99 = vmatprep.subr.mxu0 0.0
    %100 = vmatpush2.xpose.msra.mxu0 0.0
    %101 = vmatprep.subr.mxu0 0.0
    %102 = vmatpush2.xpose.msra.mxu0 0.0
    %103 = vmatprep.subr.mxu0 0.0
    %104 = vmatpush2.xpose.msra.mxu0 0.0
    %105 = vmatprep.subr.mxu0 0.0
    %106 = vmatpush2.xpose.msra.mxu0 0.0
    %107 = vmatprep.subr.mxu0 0.0
    %108 = vmatpush2.xpose.msra.mxu0 0.0
    %109 = vmatprep.subr.mxu0 0.0
    %110 = vmatpush2.xpose.msra.mxu0 0.0
    %111 = vmatprep.subr.mxu0 0.0
    %112 = vmatpush2.xpose.msra.mxu0 0.0
    %113 = vmatprep.subr.mxu0 0.0
    %114 = vmatpush2.xpose.msra.mxu0 0.0
    %v115 = vand.u32 %v37, 4294901760
    %v116 = vsub.f32 %v37, %v115
    %v117 = vand.u32 %v116, 4294901760
    %v118 = vsub.f32 %v116, %v117
    %v119 = vand.u32 %v118, 4294901760
    %120 = vmatprep.mubr.f32.mxu0 %v119
    %v121 = vand.u32 %v36, 4294901760
    %v122 = vsub.f32 %v36, %v121
    %v123 = vand.u32 %v122, 4294901760
    %v124 = vsub.f32 %v122, %v123
    %v125 = vand.u32 %v124, 4294901760
    %126 = vmatmul.mubr.f32.gmra.mxu0 %v125
    %v127 = vpop.f32.mrf.mxu0
    %v128 = vadd.f32 0.0, %v127
    %v129 = vpop.f32.mrf.mxu0
    %130 = vdwg.mxu0
    %131 = vmatprep.subr.mxu0 0.0
    %132 = vmatpush1.xpose.msra.mxu0 0.0
    %133 = vmatprep.subr.mxu0 0.0
    %134 = vmatpush1.xpose.msra.mxu0 0.0
    %135 = vmatprep.subr.mxu0 0.0
    %136 = vmatpush1.xpose.msra.mxu0 0.0
    %137 = vmatprep.subr.mxu0 0.0
    %138 = vmatpush1.xpose.msra.mxu0 0.0
    %139 = vmatprep.subr.mxu0 0.0
    %140 = vmatpush1.xpose.msra.mxu0 0.0
    %141 = vmatprep.subr.mxu0 0.0
    %142 = vmatpush1.xpose.msra.mxu0 0.0
    %143 = vmatprep.subr.mxu0 0.0
    %144 = vmatpush1.xpose.msra.mxu0 0.0
    %145 = vmatprep.subr.mxu0 0.0
    %146 = vmatpush1.xpose.msra.mxu0 0.0
    %147 = vmatprep.subr.mxu0 0.0
    %148 = vmatpush1.xpose.msra.mxu0 0.0
    %149 = vmatprep.subr.mxu0 0.0
    %150 = vmatpush1.xpose.msra.mxu0 0.0
    %151 = vmatprep.subr.mxu0 0.0
    %152 = vmatpush1.xpose.msra.mxu0 0.0
    %153 = vmatprep.subr.mxu0 0.0
    %154 = vmatpush1.xpose.msra.mxu0 0.0
    %155 = vmatprep.subr.mxu0 0.0
    %156 = vmatpush1.xpose.msra.mxu0 0.0
    %157 = vmatprep.subr.mxu0 0.0
    %158 = vmatpush1.xpose.msra.mxu0 0.0
    %159 = vmatprep.subr.mxu0 0.0
    %160 = vmatpush1.xpose.msra.mxu0 0.0
    %v161 = vand.u32 %v40, 4294901760
    %v162 = vsub.f32 %v40, %v161
    %v163 = vand.u32 %v162, 4294901760
    %v164 = vsub.f32 %v162, %v163
    %v165 = vand.u32 %v164, 4294901760
    %166 = vmatprep.subr.mxu0 %v165
    %v167 = vand.u32 %v39, 4294901760
    %v168 = vsub.f32 %v39, %v167
    %v169 = vand.u32 %v168, 4294901760
    %v170 = vsub.f32 %v168, %v169
    %v171 = vand.u32 %v170, 4294901760
    %172 = vmatpush1.xpose.msra.mxu0 %v171
    %173 = vmatprep.subr.mxu0 0.0
    %174 = vmatpush2.xpose.msra.mxu0 0.0
    %175 = vmatprep.subr.mxu0 0.0
    %176 = vmatpush2.xpose.msra.mxu0 0.0
    %177 = vmatprep.subr.mxu0 0.0
    %178 = vmatpush2.xpose.msra.mxu0 0.0
    %179 = vmatprep.subr.mxu0 0.0
    %180 = vmatpush2.xpose.msra.mxu0 0.0
    %181 = vmatprep.subr.mxu0 0.0
    %182 = vmatpush2.xpose.msra.mxu0 0.0
    %183 = vmatprep.subr.mxu0 0.0
    %184 = vmatpush2.xpose.msra.mxu0 0.0
    %185 = vmatprep.subr.mxu0 0.0
    %186 = vmatpush2.xpose.msra.mxu0 0.0
    %187 = vmatprep.subr.mxu0 0.0
    %188 = vmatpush2.xpose.msra.mxu0 0.0
    %189 = vmatprep.subr.mxu0 0.0
    %190 = vmatpush2.xpose.msra.mxu0 0.0
    %191 = vmatprep.subr.mxu0 0.0
    %192 = vmatpush2.xpose.msra.mxu0 0.0
    %193 = vmatprep.subr.mxu0 0.0
    %194 = vmatpush2.xpose.msra.mxu0 0.0
    %195 = vmatprep.subr.mxu0 0.0
    %196 = vmatpush2.xpose.msra.mxu0 0.0
    %197 = vmatprep.subr.mxu0 0.0
    %198 = vmatpush2.xpose.msra.mxu0 0.0
    %199 = vmatprep.subr.mxu0 0.0
    %200 = vmatpush2.xpose.msra.mxu0 0.0
    %201 = vmatprep.subr.mxu0 0.0
    %202 = vmatpush2.xpose.msra.mxu0 0.0
    %203 = vmatprep.subr.mxu0 0.0
    %204 = vmatpush2.xpose.msra.mxu0 0.0
    %v205 = vand.u32 %v37, 4294901760
    %206 = vmatprep.mubr.f32.mxu0 %v205
    %v207 = vand.u32 %v36, 4294901760
    %208 = vmatmul.mubr.f32.gmra.mxu0 %v207
    %v209 = vpop.f32.mrf.mxu0
    %v210 = vadd.f32 %v128, %v209
    %v211 = vpop.f32.mrf.mxu0
    %212 = vdwg.mxu0
    %213 = vmatprep.subr.mxu0 0.0
    %214 = vmatpush1.xpose.msra.mxu0 0.0
    %215 = vmatprep.subr.mxu0 0.0
    %216 = vmatpush1.xpose.msra.mxu0 0.0
    %217 = vmatprep.subr.mxu0 0.0
    %218 = vmatpush1.xpose.msra.mxu0 0.0
    %219 = vmatprep.subr.mxu0 0.0
    %220 = vmatpush1.xpose.msra.mxu0 0.0
    %221 = vmatprep.subr.mxu0 0.0
    %222 = vmatpush1.xpose.msra.mxu0 0.0
    %223 = vmatprep.subr.mxu0 0.0
    %224 = vmatpush1.xpose.msra.mxu0 0.0
    %225 = vmatprep.subr.mxu0 0.0
    %226 = vmatpush1.xpose.msra.mxu0 0.0
    %227 = vmatprep.subr.mxu0 0.0
    %228 = vmatpush1.xpose.msra.mxu0 0.0
    %229 = vmatprep.subr.mxu0 0.0
    %230 = vmatpush1.xpose.msra.mxu0 0.0
    %231 = vmatprep.subr.mxu0 0.0
    %232 = vmatpush1.xpose.msra.mxu0 0.0
    %233 = vmatprep.subr.mxu0 0.0
    %234 = vmatpush1.xpose.msra.mxu0 0.0
    %235 = vmatprep.subr.mxu0 0.0
    %236 = vmatpush1.xpose.msra.mxu0 0.0
    %237 = vmatprep.subr.mxu0 0.0
    %238 = vmatpush1.xpose.msra.mxu0 0.0
    %239 = vmatprep.subr.mxu0 0.0
    %240 = vmatpush1.xpose.msra.mxu0 0.0
    %241 = vmatprep.subr.mxu0 0.0
    %242 = vmatpush1.xpose.msra.mxu0 0.0
    %v243 = vand.u32 %v40, 4294901760
    %v244 = vsub.f32 %v40, %v243
    %245 = vmatprep.subr.mxu0 %v244
    %v246 = vand.u32 %v39, 4294901760
    %v247 = vsub.f32 %v39, %v246
    %248 = vmatpush1.xpose.msra.mxu0 %v247
    %249 = vmatprep.subr.mxu0 0.0
    %250 = vmatpush2.xpose.msra.mxu0 0.0
    %251 = vmatprep.subr.mxu0 0.0
    %252 = vmatpush2.xpose.msra.mxu0 0.0
    %253 = vmatprep.subr.mxu0 0.0
    %254 = vmatpush2.xpose.msra.mxu0 0.0
    %255 = vmatprep.subr.mxu0 0.0
    %256 = vmatpush2.xpose.msra.mxu0 0.0
    %257 = vmatprep.subr.mxu0 0.0
    %258 = vmatpush2.xpose.msra.mxu0 0.0
    %259 = vmatprep.subr.mxu0 0.0
    %260 = vmatpush2.xpose.msra.mxu0 0.0
    %261 = vmatprep.subr.mxu0 0.0
    %262 = vmatpush2.xpose.msra.mxu0 0.0
    %263 = vmatprep.subr.mxu0 0.0
    %264 = vmatpush2.xpose.msra.mxu0 0.0
    %265 = vmatprep.subr.mxu0 0.0
    %266 = vmatpush2.xpose.msra.mxu0 0.0
    %267 = vmatprep.subr.mxu0 0.0
    %268 = vmatpush2.xpose.msra.mxu0 0.0
    %269 = vmatprep.subr.mxu0 0.0
    %270 = vmatpush2.xpose.msra.mxu0 0.0
    %271 = vmatprep.subr.mxu0 0.0
    %272 = vmatpush2.xpose.msra.mxu0 0.0
    %273 = vmatprep.subr.mxu0 0.0
    %274 = vmatpush2.xpose.msra.mxu0 0.0
    %275 = vmatprep.subr.mxu0 0.0
    %276 = vmatpush2.xpose.msra.mxu0 0.0
    %277 = vmatprep.subr.mxu0 0.0
    %278 = vmatpush2.xpose.msra.mxu0 0.0
    %279 = vmatprep.subr.mxu0 0.0
    %280 = vmatpush2.xpose.msra.mxu0 0.0
    %v281 = vand.u32 %v37, 4294901760
    %v282 = vsub.f32 %v37, %v281
    %283 = vmatprep.mubr.f32.mxu0 %v282
    %v284 = vand.u32 %v36, 4294901760
    %v285 = vsub.f32 %v36, %v284
    %286 = vmatmul.mubr.f32.gmra.mxu0 %v285
    %v287 = vpop.f32.mrf.mxu0
    %v288 = vadd.f32 %v210, %v287
    %v289 = vpop.f32.mrf.mxu0
    %290 = vdwg.mxu0
    %291 = vmatprep.subr.mxu0 0.0
    %292 = vmatpush1.xpose.msra.mxu0 0.0
    %293 = vmatprep.subr.mxu0 0.0
    %294 = vmatpush1.xpose.msra.mxu0 0.0
    %295 = vmatprep.subr.mxu0 0.0
    %296 = vmatpush1.xpose.msra.mxu0 0.0
    %297 = vmatprep.subr.mxu0 0.0
    %298 = vmatpush1.xpose.msra.mxu0 0.0
    %299 = vmatprep.subr.mxu0 0.0
    %300 = vmatpush1.xpose.msra.mxu0 0.0
    %301 = vmatprep.subr.mxu0 0.0
    %302 = vmatpush1.xpose.msra.mxu0 0.0
    %303 = vmatprep.subr.mxu0 0.0
    %304 = vmatpush1.xpose.msra.mxu0 0.0
    %305 = vmatprep.subr.mxu0 0.0
    %306 = vmatpush1.xpose.msra.mxu0 0.0
    %307 = vmatprep.subr.mxu0 0.0
    %308 = vmatpush1.xpose.msra.mxu0 0.0
    %309 = vmatprep.subr.mxu0 0.0
    %310 = vmatpush1.xpose.msra.mxu0 0.0
    %311 = vmatprep.subr.mxu0 0.0
    %312 = vmatpush1.xpose.msra.mxu0 0.0
    %313 = vmatprep.subr.mxu0 0.0
    %314 = vmatpush1.xpose.msra.mxu0 0.0
    %315 = vmatprep.subr.mxu0 0.0
    %316 = vmatpush1.xpose.msra.mxu0 0.0
    %317 = vmatprep.subr.mxu0 0.0
    %318 = vmatpush1.xpose.msra.mxu0 0.0
    %319 = vmatprep.subr.mxu0 0.0
    %320 = vmatpush1.xpose.msra.mxu0 0.0
    %v321 = vand.u32 %v40, 4294901760
    %322 = vmatprep.subr.mxu0 %v321
    %v323 = vand.u32 %v39, 4294901760
    %324 = vmatpush1.xpose.msra.mxu0 %v323
    %325 = vmatprep.subr.mxu0 0.0
    %326 = vmatpush2.xpose.msra.mxu0 0.0
    %327 = vmatprep.subr.mxu0 0.0
    %328 = vmatpush2.xpose.msra.mxu0 0.0
    %329 = vmatprep.subr.mxu0 0.0
    %330 = vmatpush2.xpose.msra.mxu0 0.0
    %331 = vmatprep.subr.mxu0 0.0
    %332 = vmatpush2.xpose.msra.mxu0 0.0
    %333 = vmatprep.subr.mxu0 0.0
    %334 = vmatpush2.xpose.msra.mxu0 0.0
    %335 = vmatprep.subr.mxu0 0.0
    %336 = vmatpush2.xpose.msra.mxu0 0.0
    %337 = vmatprep.subr.mxu0 0.0
    %338 = vmatpush2.xpose.msra.mxu0 0.0
    %339 = vmatprep.subr.mxu0 0.0
    %340 = vmatpush2.xpose.msra.mxu0 0.0
    %341 = vmatprep.subr.mxu0 0.0
    %342 = vmatpush2.xpose.msra.mxu0 0.0
    %343 = vmatprep.subr.mxu0 0.0
    %344 = vmatpush2.xpose.msra.mxu0 0.0
    %345 = vmatprep.subr.mxu0 0.0
    %346 = vmatpush2.xpose.msra.mxu0 0.0
    %347 = vmatprep.subr.mxu0 0.0
    %348 = vmatpush2.xpose.msra.mxu0 0.0
    %349 = vmatprep.subr.mxu0 0.0
    %350 = vmatpush2.xpose.msra.mxu0 0.0
    %351 = vmatprep.subr.mxu0 0.0
    %352 = vmatpush2.xpose.msra.mxu0 0.0
    %353 = vmatprep.subr.mxu0 0.0
    %354 = vmatpush2.xpose.msra.mxu0 0.0
    %355 = vmatprep.subr.mxu0 0.0
    %356 = vmatpush2.xpose.msra.mxu0 0.0
    %v357 = vand.u32 %v37, 4294901760
    %v358 = vsub.f32 %v37, %v357
    %v359 = vand.u32 %v358, 4294901760
    %360 = vmatprep.mubr.f32.mxu0 %v359
    %v361 = vand.u32 %v36, 4294901760
    %v362 = vsub.f32 %v36, %v361
    %v363 = vand.u32 %v362, 4294901760
    %364 = vmatmul.mubr.f32.gmra.mxu0 %v363
    %v365 = vpop.f32.mrf.mxu0
    %v366 = vadd.f32 %v288, %v365
    %v367 = vpop.f32.mrf.mxu0
    %368 = vdwg.mxu0
    %369 = vmatprep.subr.mxu0 0.0
    %370 = vmatpush1.xpose.msra.mxu0 0.0
    %371 = vmatprep.subr.mxu0 0.0
    %372 = vmatpush1.xpose.msra.mxu0 0.0
    %373 = vmatprep.subr.mxu0 0.0
    %374 = vmatpush1.xpose.msra.mxu0 0.0
    %375 = vmatprep.subr.mxu0 0.0
    %376 = vmatpush1.xpose.msra.mxu0 0.0
    %377 = vmatprep.subr.mxu0 0.0
    %378 = vmatpush1.xpose.msra.mxu0 0.0
    %379 = vmatprep.subr.mxu0 0.0
    %380 = vmatpush1.xpose.msra.mxu0 0.0
    %381 = vmatprep.subr.mxu0 0.0
    %382 = vmatpush1.xpose.msra.mxu0 0.0
    %383 = vmatprep.subr.mxu0 0.0
    %384 = vmatpush1.xpose.msra.mxu0 0.0
    %385 = vmatprep.subr.mxu0 0.0
    %386 = vmatpush1.xpose.msra.mxu0 0.0
    %387 = vmatprep.subr.mxu0 0.0
    %388 = vmatpush1.xpose.msra.mxu0 0.0
    %389 = vmatprep.subr.mxu0 0.0
    %390 = vmatpush1.xpose.msra.mxu0 0.0
    %391 = vmatprep.subr.mxu0 0.0
    %392 = vmatpush1.xpose.msra.mxu0 0.0
    %393 = vmatprep.subr.mxu0 0.0
    %394 = vmatpush1.xpose.msra.mxu0 0.0
    %395 = vmatprep.subr.mxu0 0.0
    %396 = vmatpush1.xpose.msra.mxu0 0.0
    %397 = vmatprep.subr.mxu0 0.0
    %398 = vmatpush1.xpose.msra.mxu0 0.0
    %v399 = vand.u32 %v40, 4294901760
    %v400 = vsub.f32 %v40, %v399
    %v401 = vand.u32 %v400, 4294901760
    %402 = vmatprep.subr.mxu0 %v401
    %v403 = vand.u32 %v39, 4294901760
    %v404 = vsub.f32 %v39, %v403
    %v405 = vand.u32 %v404, 4294901760
    %406 = vmatpush1.xpose.msra.mxu0 %v405
    %407 = vmatprep.subr.mxu0 0.0
    %408 = vmatpush2.xpose.msra.mxu0 0.0
    %409 = vmatprep.subr.mxu0 0.0
    %410 = vmatpush2.xpose.msra.mxu0 0.0
    %411 = vmatprep.subr.mxu0 0.0
    %412 = vmatpush2.xpose.msra.mxu0 0.0
    %413 = vmatprep.subr.mxu0 0.0
    %414 = vmatpush2.xpose.msra.mxu0 0.0
    %415 = vmatprep.subr.mxu0 0.0
    %416 = vmatpush2.xpose.msra.mxu0 0.0
    %417 = vmatprep.subr.mxu0 0.0
    %418 = vmatpush2.xpose.msra.mxu0 0.0
    %419 = vmatprep.subr.mxu0 0.0
    %420 = vmatpush2.xpose.msra.mxu0 0.0
    %421 = vmatprep.subr.mxu0 0.0
    %422 = vmatpush2.xpose.msra.mxu0 0.0
    %423 = vmatprep.subr.mxu0 0.0
    %424 = vmatpush2.xpose.msra.mxu0 0.0
    %425 = vmatprep.subr.mxu0 0.0
    %426 = vmatpush2.xpose.msra.mxu0 0.0
    %427 = vmatprep.subr.mxu0 0.0
    %428 = vmatpush2.xpose.msra.mxu0 0.0
    %429 = vmatprep.subr.mxu0 0.0
    %430 = vmatpush2.xpose.msra.mxu0 0.0
    %431 = vmatprep.subr.mxu0 0.0
    %432 = vmatpush2.xpose.msra.mxu0 0.0
    %433 = vmatprep.subr.mxu0 0.0
    %434 = vmatpush2.xpose.msra.mxu0 0.0
    %435 = vmatprep.subr.mxu0 0.0
    %436 = vmatpush2.xpose.msra.mxu0 0.0
    %437 = vmatprep.subr.mxu0 0.0
    %438 = vmatpush2.xpose.msra.mxu0 0.0
    %v439 = vand.u32 %v37, 4294901760
    %440 = vmatprep.mubr.f32.mxu0 %v439
    %v441 = vand.u32 %v36, 4294901760
    %442 = vmatmul.mubr.f32.gmra.mxu0 %v441
    %v443 = vpop.f32.mrf.mxu0
    %v444 = vadd.f32 %v366, %v443
    %v445 = vpop.f32.mrf.mxu0
    %446 = vdwg.mxu0
    %447 = vmatprep.subr.mxu0 0.0
    %448 = vmatpush1.xpose.msra.mxu0 0.0
    %449 = vmatprep.subr.mxu0 0.0
    %450 = vmatpush1.xpose.msra.mxu0 0.0
    %451 = vmatprep.subr.mxu0 0.0
    %452 = vmatpush1.xpose.msra.mxu0 0.0
    %453 = vmatprep.subr.mxu0 0.0
    %454 = vmatpush1.xpose.msra.mxu0 0.0
    %455 = vmatprep.subr.mxu0 0.0
    %456 = vmatpush1.xpose.msra.mxu0 0.0
    %457 = vmatprep.subr.mxu0 0.0
    %458 = vmatpush1.xpose.msra.mxu0 0.0
    %459 = vmatprep.subr.mxu0 0.0
    %460 = vmatpush1.xpose.msra.mxu0 0.0
    %461 = vmatprep.subr.mxu0 0.0
    %462 = vmatpush1.xpose.msra.mxu0 0.0
    %463 = vmatprep.subr.mxu0 0.0
    %464 = vmatpush1.xpose.msra.mxu0 0.0
    %465 = vmatprep.subr.mxu0 0.0
    %466 = vmatpush1.xpose.msra.mxu0 0.0
    %467 = vmatprep.subr.mxu0 0.0
    %468 = vmatpush1.xpose.msra.mxu0 0.0
    %469 = vmatprep.subr.mxu0 0.0
    %470 = vmatpush1.xpose.msra.mxu0 0.0
    %471 = vmatprep.subr.mxu0 0.0
    %472 = vmatpush1.xpose.msra.mxu0 0.0
    %473 = vmatprep.subr.mxu0 0.0
    %474 = vmatpush1.xpose.msra.mxu0 0.0
    %475 = vmatprep.subr.mxu0 0.0
    %476 = vmatpush1.xpose.msra.mxu0 0.0
    %v477 = vand.u32 %v40, 4294901760
    %478 = vmatprep.subr.mxu0 %v477
    %v479 = vand.u32 %v39, 4294901760
    %480 = vmatpush1.xpose.msra.mxu0 %v479
    %481 = vmatprep.subr.mxu0 0.0
    %482 = vmatpush2.xpose.msra.mxu0 0.0
    %483 = vmatprep.subr.mxu0 0.0
    %484 = vmatpush2.xpose.msra.mxu0 0.0
    %485 = vmatprep.subr.mxu0 0.0
    %486 = vmatpush2.xpose.msra.mxu0 0.0
    %487 = vmatprep.subr.mxu0 0.0
    %488 = vmatpush2.xpose.msra.mxu0 0.0
    %489 = vmatprep.subr.mxu0 0.0
    %490 = vmatpush2.xpose.msra.mxu0 0.0
    %491 = vmatprep.subr.mxu0 0.0
    %492 = vmatpush2.xpose.msra.mxu0 0.0
    %493 = vmatprep.subr.mxu0 0.0
    %494 = vmatpush2.xpose.msra.mxu0 0.0
    %495 = vmatprep.subr.mxu0 0.0
    %496 = vmatpush2.xpose.msra.mxu0 0.0
    %497 = vmatprep.subr.mxu0 0.0
    %498 = vmatpush2.xpose.msra.mxu0 0.0
    %499 = vmatprep.subr.mxu0 0.0
    %500 = vmatpush2.xpose.msra.mxu0 0.0
    %501 = vmatprep.subr.mxu0 0.0
    %502 = vmatpush2.xpose.msra.mxu0 0.0
    %503 = vmatprep.subr.mxu0 0.0
    %504 = vmatpush2.xpose.msra.mxu0 0.0
    %505 = vmatprep.subr.mxu0 0.0
    %506 = vmatpush2.xpose.msra.mxu0 0.0
    %507 = vmatprep.subr.mxu0 0.0
    %508 = vmatpush2.xpose.msra.mxu0 0.0
    %509 = vmatprep.subr.mxu0 0.0
    %510 = vmatpush2.xpose.msra.mxu0 0.0
    %511 = vmatprep.subr.mxu0 0.0
    %512 = vmatpush2.xpose.msra.mxu0 0.0
    %v513 = vand.u32 %v37, 4294901760
    %514 = vmatprep.mubr.f32.mxu0 %v513
    %v515 = vand.u32 %v36, 4294901760
    %516 = vmatmul.mubr.f32.gmra.mxu0 %v515
    %v517 = vpop.f32.mrf.mxu0
    %v518 = vadd.f32 %v444, %v517
    %v519 = vpop.f32.mrf.mxu0
    %520 = vdwg.mxu0
    %521 = vmatprep.subr.mxu0 0.0
    %522 = vmatpush1.xpose.msra.mxu0 0.0
    %523 = vmatprep.subr.mxu0 0.0
    %524 = vmatpush1.xpose.msra.mxu0 0.0
    %525 = vmatprep.subr.mxu0 0.0
    %526 = vmatpush1.xpose.msra.mxu0 0.0
    %527 = vmatprep.subr.mxu0 0.0
    %528 = vmatpush1.xpose.msra.mxu0 0.0
    %529 = vmatprep.subr.mxu0 0.0
    %530 = vmatpush1.xpose.msra.mxu0 0.0
    %531 = vmatprep.subr.mxu0 0.0
    %532 = vmatpush1.xpose.msra.mxu0 0.0
    %533 = vmatprep.subr.mxu0 0.0
    %534 = vmatpush1.xpose.msra.mxu0 0.0
    %535 = vmatprep.subr.mxu0 0.0
    %536 = vmatpush1.xpose.msra.mxu0 0.0
    %537 = vmatprep.subr.mxu0 0.0
    %538 = vmatpush1.xpose.msra.mxu0 0.0
    %539 = vmatprep.subr.mxu0 0.0
    %540 = vmatpush1.xpose.msra.mxu0 0.0
    %541 = vmatprep.subr.mxu0 0.0
    %542 = vmatpush1.xpose.msra.mxu0 0.0
    %543 = vmatprep.subr.mxu0 0.0
    %544 = vmatpush1.xpose.msra.mxu0 0.0
    %545 = vmatprep.subr.mxu0 0.0
    %546 = vmatpush1.xpose.msra.mxu0 0.0
    %547 = vmatprep.subr.mxu0 0.0
    %548 = vmatpush1.xpose.msra.mxu0 0.0
    %549 = vmatprep.subr.mxu0 0.0
    %550 = vmatpush1.xpose.msra.mxu0 0.0
    %551 = vmatprep.subr.mxu0 0.0
    %v552 = vand.u32 %v47, 4294901760
    %553 = vmatpush1.xpose.msra.mxu0 %v552
    %554 = vmatprep.subr.mxu0 0.0
    %555 = vmatpush2.xpose.msra.mxu0 0.0
    %556 = vmatprep.subr.mxu0 0.0
    %557 = vmatpush2.xpose.msra.mxu0 0.0
    %558 = vmatprep.subr.mxu0 0.0
    %559 = vmatpush2.xpose.msra.mxu0 0.0
    %560 = vmatprep.subr.mxu0 0.0
    %561 = vmatpush2.xpose.msra.mxu0 0.0
    %562 = vmatprep.subr.mxu0 0.0
    %563 = vmatpush2.xpose.msra.mxu0 0.0
    %564 = vmatprep.subr.mxu0 0.0
    %565 = vmatpush2.xpose.msra.mxu0 0.0
    %566 = vmatprep.subr.mxu0 0.0
    %567 = vmatpush2.xpose.msra.mxu0 0.0
    %568 = vmatprep.subr.mxu0 0.0
    %569 = vmatpush2.xpose.msra.mxu0 0.0
    %570 = vmatprep.subr.mxu0 0.0
    %571 = vmatpush2.xpose.msra.mxu0 0.0
    %572 = vmatprep.subr.mxu0 0.0
    %573 = vmatpush2.xpose.msra.mxu0 0.0
    %574 = vmatprep.subr.mxu0 0.0
    %575 = vmatpush2.xpose.msra.mxu0 0.0
    %576 = vmatprep.subr.mxu0 0.0
    %577 = vmatpush2.xpose.msra.mxu0 0.0
    %578 = vmatprep.subr.mxu0 0.0
    %579 = vmatpush2.xpose.msra.mxu0 0.0
    %580 = vmatprep.subr.mxu0 0.0
    %581 = vmatpush2.xpose.msra.mxu0 0.0
    %582 = vmatprep.subr.mxu0 0.0
    %583 = vmatpush2.xpose.msra.mxu0 0.0
    %584 = vmatprep.subr.mxu0 0.0
    %585 = vmatpush2.xpose.msra.mxu0 0.0
    %586 = vmatprep.mubr.f32.mxu0 0.0
    %v587 = vand.u32 %v44, 4294901760
    %v588 = vsub.f32 %v44, %v587
    %v589 = vand.u32 %v588, 4294901760
    %v590 = vsub.f32 %v588, %v589
    %v591 = vand.u32 %v590, 4294901760
    %592 = vmatmul.mubr.f32.gmra.mxu0 %v591
    %v593 = vpop.f32.mrf.mxu0
    %v594 = vadd.f32 %v518, %v593
    %v595 = vpop.f32.mrf.mxu0
    %596 = vdwg.mxu0
    %597 = vmatprep.subr.mxu0 0.0
    %598 = vmatpush1.xpose.msra.mxu0 0.0
    %599 = vmatprep.subr.mxu0 0.0
    %600 = vmatpush1.xpose.msra.mxu0 0.0
    %601 = vmatprep.subr.mxu0 0.0
    %602 = vmatpush1.xpose.msra.mxu0 0.0
    %603 = vmatprep.subr.mxu0 0.0
    %604 = vmatpush1.xpose.msra.mxu0 0.0
    %605 = vmatprep.subr.mxu0 0.0
    %606 = vmatpush1.xpose.msra.mxu0 0.0
    %607 = vmatprep.subr.mxu0 0.0
    %608 = vmatpush1.xpose.msra.mxu0 0.0
    %609 = vmatprep.subr.mxu0 0.0
    %610 = vmatpush1.xpose.msra.mxu0 0.0
    %611 = vmatprep.subr.mxu0 0.0
    %612 = vmatpush1.xpose.msra.mxu0 0.0
    %613 = vmatprep.subr.mxu0 0.0
    %614 = vmatpush1.xpose.msra.mxu0 0.0
    %615 = vmatprep.subr.mxu0 0.0
    %616 = vmatpush1.xpose.msra.mxu0 0.0
    %617 = vmatprep.subr.mxu0 0.0
    %618 = vmatpush1.xpose.msra.mxu0 0.0
    %619 = vmatprep.subr.mxu0 0.0
    %620 = vmatpush1.xpose.msra.mxu0 0.0
    %621 = vmatprep.subr.mxu0 0.0
    %622 = vmatpush1.xpose.msra.mxu0 0.0
    %623 = vmatprep.subr.mxu0 0.0
    %624 = vmatpush1.xpose.msra.mxu0 0.0
    %625 = vmatprep.subr.mxu0 0.0
    %626 = vmatpush1.xpose.msra.mxu0 0.0
    %627 = vmatprep.subr.mxu0 0.0
    %v628 = vand.u32 %v47, 4294901760
    %v629 = vsub.f32 %v47, %v628
    %v630 = vand.u32 %v629, 4294901760
    %v631 = vsub.f32 %v629, %v630
    %v632 = vand.u32 %v631, 4294901760
    %633 = vmatpush1.xpose.msra.mxu0 %v632
    %634 = vmatprep.subr.mxu0 0.0
    %635 = vmatpush2.xpose.msra.mxu0 0.0
    %636 = vmatprep.subr.mxu0 0.0
    %637 = vmatpush2.xpose.msra.mxu0 0.0
    %638 = vmatprep.subr.mxu0 0.0
    %639 = vmatpush2.xpose.msra.mxu0 0.0
    %640 = vmatprep.subr.mxu0 0.0
    %641 = vmatpush2.xpose.msra.mxu0 0.0
    %642 = vmatprep.subr.mxu0 0.0
    %643 = vmatpush2.xpose.msra.mxu0 0.0
    %644 = vmatprep.subr.mxu0 0.0
    %645 = vmatpush2.xpose.msra.mxu0 0.0
    %646 = vmatprep.subr.mxu0 0.0
    %647 = vmatpush2.xpose.msra.mxu0 0.0
    %648 = vmatprep.subr.mxu0 0.0
    %649 = vmatpush2.xpose.msra.mxu0 0.0
    %650 = vmatprep.subr.mxu0 0.0
    %651 = vmatpush2.xpose.msra.mxu0 0.0
    %652 = vmatprep.subr.mxu0 0.0
    %653 = vmatpush2.xpose.msra.mxu0 0.0
    %654 = vmatprep.subr.mxu0 0.0
    %655 = vmatpush2.xpose.msra.mxu0 0.0
    %656 = vmatprep.subr.mxu0 0.0
    %657 = vmatpush2.xpose.msra.mxu0 0.0
    %658 = vmatprep.subr.mxu0 0.0
    %659 = vmatpush2.xpose.msra.mxu0 0.0
    %660 = vmatprep.subr.mxu0 0.0
    %661 = vmatpush2.xpose.msra.mxu0 0.0
    %662 = vmatprep.subr.mxu0 0.0
    %663 = vmatpush2.xpose.msra.mxu0 0.0
    %664 = vmatprep.subr.mxu0 0.0
    %665 = vmatpush2.xpose.msra.mxu0 0.0
    %666 = vmatprep.mubr.f32.mxu0 0.0
    %v667 = vand.u32 %v44, 4294901760
    %668 = vmatmul.mubr.f32.gmra.mxu0 %v667
    %v669 = vpop.f32.mrf.mxu0
    %v670 = vadd.f32 %v594, %v669
    %v671 = vpop.f32.mrf.mxu0
    %672 = vdwg.mxu0
    %673 = vmatprep.subr.mxu0 0.0
    %674 = vmatpush1.xpose.msra.mxu0 0.0
    %675 = vmatprep.subr.mxu0 0.0
    %676 = vmatpush1.xpose.msra.mxu0 0.0
    %677 = vmatprep.subr.mxu0 0.0
    %678 = vmatpush1.xpose.msra.mxu0 0.0
    %679 = vmatprep.subr.mxu0 0.0
    %680 = vmatpush1.xpose.msra.mxu0 0.0
    %681 = vmatprep.subr.mxu0 0.0
    %682 = vmatpush1.xpose.msra.mxu0 0.0
    %683 = vmatprep.subr.mxu0 0.0
    %684 = vmatpush1.xpose.msra.mxu0 0.0
    %685 = vmatprep.subr.mxu0 0.0
    %686 = vmatpush1.xpose.msra.mxu0 0.0
    %687 = vmatprep.subr.mxu0 0.0
    %688 = vmatpush1.xpose.msra.mxu0 0.0
    %689 = vmatprep.subr.mxu0 0.0
    %690 = vmatpush1.xpose.msra.mxu0 0.0
    %691 = vmatprep.subr.mxu0 0.0
    %692 = vmatpush1.xpose.msra.mxu0 0.0
    %693 = vmatprep.subr.mxu0 0.0
    %694 = vmatpush1.xpose.msra.mxu0 0.0
    %695 = vmatprep.subr.mxu0 0.0
    %696 = vmatpush1.xpose.msra.mxu0 0.0
    %697 = vmatprep.subr.mxu0 0.0
    %698 = vmatpush1.xpose.msra.mxu0 0.0
    %699 = vmatprep.subr.mxu0 0.0
    %700 = vmatpush1.xpose.msra.mxu0 0.0
    %701 = vmatprep.subr.mxu0 0.0
    %702 = vmatpush1.xpose.msra.mxu0 0.0
    %703 = vmatprep.subr.mxu0 0.0
    %v704 = vand.u32 %v47, 4294901760
    %v705 = vsub.f32 %v47, %v704
    %706 = vmatpush1.xpose.msra.mxu0 %v705
    %707 = vmatprep.subr.mxu0 0.0
    %708 = vmatpush2.xpose.msra.mxu0 0.0
    %709 = vmatprep.subr.mxu0 0.0
    %710 = vmatpush2.xpose.msra.mxu0 0.0
    %711 = vmatprep.subr.mxu0 0.0
    %712 = vmatpush2.xpose.msra.mxu0 0.0
    %713 = vmatprep.subr.mxu0 0.0
    %714 = vmatpush2.xpose.msra.mxu0 0.0
    %715 = vmatprep.subr.mxu0 0.0
    %716 = vmatpush2.xpose.msra.mxu0 0.0
    %717 = vmatprep.subr.mxu0 0.0
    %718 = vmatpush2.xpose.msra.mxu0 0.0
    %719 = vmatprep.subr.mxu0 0.0
    %720 = vmatpush2.xpose.msra.mxu0 0.0
    %721 = vmatprep.subr.mxu0 0.0
    %722 = vmatpush2.xpose.msra.mxu0 0.0
    %723 = vmatprep.subr.mxu0 0.0
    %724 = vmatpush2.xpose.msra.mxu0 0.0
    %725 = vmatprep.subr.mxu0 0.0
    %726 = vmatpush2.xpose.msra.mxu0 0.0
    %727 = vmatprep.subr.mxu0 0.0
    %728 = vmatpush2.xpose.msra.mxu0 0.0
    %729 = vmatprep.subr.mxu0 0.0
    %730 = vmatpush2.xpose.msra.mxu0 0.0
    %731 = vmatprep.subr.mxu0 0.0
    %732 = vmatpush2.xpose.msra.mxu0 0.0
    %733 = vmatprep.subr.mxu0 0.0
    %734 = vmatpush2.xpose.msra.mxu0 0.0
    %735 = vmatprep.subr.mxu0 0.0
    %736 = vmatpush2.xpose.msra.mxu0 0.0
    %737 = vmatprep.subr.mxu0 0.0
    %738 = vmatpush2.xpose.msra.mxu0 0.0
    %739 = vmatprep.mubr.f32.mxu0 0.0
    %v740 = vand.u32 %v44, 4294901760
    %v741 = vsub.f32 %v44, %v740
    %742 = vmatmul.mubr.f32.gmra.mxu0 %v741
    %v743 = vpop.f32.mrf.mxu0
    %v744 = vadd.f32 %v670, %v743
    %v745 = vpop.f32.mrf.mxu0
    %746 = vdwg.mxu0
    %747 = vmatprep.subr.mxu0 0.0
    %748 = vmatpush1.xpose.msra.mxu0 0.0
    %749 = vmatprep.subr.mxu0 0.0
    %750 = vmatpush1.xpose.msra.mxu0 0.0
    %751 = vmatprep.subr.mxu0 0.0
    %752 = vmatpush1.xpose.msra.mxu0 0.0
    %753 = vmatprep.subr.mxu0 0.0
    %754 = vmatpush1.xpose.msra.mxu0 0.0
    %755 = vmatprep.subr.mxu0 0.0
    %756 = vmatpush1.xpose.msra.mxu0 0.0
    %757 = vmatprep.subr.mxu0 0.0
    %758 = vmatpush1.xpose.msra.mxu0 0.0
    %759 = vmatprep.subr.mxu0 0.0
    %760 = vmatpush1.xpose.msra.mxu0 0.0
    %761 = vmatprep.subr.mxu0 0.0
    %762 = vmatpush1.xpose.msra.mxu0 0.0
    %763 = vmatprep.subr.mxu0 0.0
    %764 = vmatpush1.xpose.msra.mxu0 0.0
    %765 = vmatprep.subr.mxu0 0.0
    %766 = vmatpush1.xpose.msra.mxu0 0.0
    %767 = vmatprep.subr.mxu0 0.0
    %768 = vmatpush1.xpose.msra.mxu0 0.0
    %769 = vmatprep.subr.mxu0 0.0
    %770 = vmatpush1.xpose.msra.mxu0 0.0
    %771 = vmatprep.subr.mxu0 0.0
    %772 = vmatpush1.xpose.msra.mxu0 0.0
    %773 = vmatprep.subr.mxu0 0.0
    %774 = vmatpush1.xpose.msra.mxu0 0.0
    %775 = vmatprep.subr.mxu0 0.0
    %776 = vmatpush1.xpose.msra.mxu0 0.0
    %777 = vmatprep.subr.mxu0 0.0
    %v778 = vand.u32 %v47, 4294901760
    %779 = vmatpush1.xpose.msra.mxu0 %v778
    %780 = vmatprep.subr.mxu0 0.0
    %781 = vmatpush2.xpose.msra.mxu0 0.0
    %782 = vmatprep.subr.mxu0 0.0
    %783 = vmatpush2.xpose.msra.mxu0 0.0
    %784 = vmatprep.subr.mxu0 0.0
    %785 = vmatpush2.xpose.msra.mxu0 0.0
    %786 = vmatprep.subr.mxu0 0.0
    %787 = vmatpush2.xpose.msra.mxu0 0.0
    %788 = vmatprep.subr.mxu0 0.0
    %789 = vmatpush2.xpose.msra.mxu0 0.0
    %790 = vmatprep.subr.mxu0 0.0
    %791 = vmatpush2.xpose.msra.mxu0 0.0
    %792 = vmatprep.subr.mxu0 0.0
    %793 = vmatpush2.xpose.msra.mxu0 0.0
    %794 = vmatprep.subr.mxu0 0.0
    %795 = vmatpush2.xpose.msra.mxu0 0.0
    %796 = vmatprep.subr.mxu0 0.0
    %797 = vmatpush2.xpose.msra.mxu0 0.0
    %798 = vmatprep.subr.mxu0 0.0
    %799 = vmatpush2.xpose.msra.mxu0 0.0
    %800 = vmatprep.subr.mxu0 0.0
    %801 = vmatpush2.xpose.msra.mxu0 0.0
    %802 = vmatprep.subr.mxu0 0.0
    %803 = vmatpush2.xpose.msra.mxu0 0.0
    %804 = vmatprep.subr.mxu0 0.0
    %805 = vmatpush2.xpose.msra.mxu0 0.0
    %806 = vmatprep.subr.mxu0 0.0
    %807 = vmatpush2.xpose.msra.mxu0 0.0
    %808 = vmatprep.subr.mxu0 0.0
    %809 = vmatpush2.xpose.msra.mxu0 0.0
    %810 = vmatprep.subr.mxu0 0.0
    %811 = vmatpush2.xpose.msra.mxu0 0.0
    %812 = vmatprep.mubr.f32.mxu0 0.0
    %v813 = vand.u32 %v44, 4294901760
    %v814 = vsub.f32 %v44, %v813
    %v815 = vand.u32 %v814, 4294901760
    %816 = vmatmul.mubr.f32.gmra.mxu0 %v815
    %v817 = vpop.f32.mrf.mxu0
    %v818 = vadd.f32 %v744, %v817
    %v819 = vpop.f32.mrf.mxu0
    %820 = vdwg.mxu0
    %821 = vmatprep.subr.mxu0 0.0
    %822 = vmatpush1.xpose.msra.mxu0 0.0
    %823 = vmatprep.subr.mxu0 0.0
    %824 = vmatpush1.xpose.msra.mxu0 0.0
    %825 = vmatprep.subr.mxu0 0.0
    %826 = vmatpush1.xpose.msra.mxu0 0.0
    %827 = vmatprep.subr.mxu0 0.0
    %828 = vmatpush1.xpose.msra.mxu0 0.0
    %829 = vmatprep.subr.mxu0 0.0
    %830 = vmatpush1.xpose.msra.mxu0 0.0
    %831 = vmatprep.subr.mxu0 0.0
    %832 = vmatpush1.xpose.msra.mxu0 0.0
    %833 = vmatprep.subr.mxu0 0.0
    %834 = vmatpush1.xpose.msra.mxu0 0.0
    %835 = vmatprep.subr.mxu0 0.0
    %836 = vmatpush1.xpose.msra.mxu0 0.0
    %837 = vmatprep.subr.mxu0 0.0
    %838 = vmatpush1.xpose.msra.mxu0 0.0
    %839 = vmatprep.subr.mxu0 0.0
    %840 = vmatpush1.xpose.msra.mxu0 0.0
    %841 = vmatprep.subr.mxu0 0.0
    %842 = vmatpush1.xpose.msra.mxu0 0.0
    %843 = vmatprep.subr.mxu0 0.0
    %844 = vmatpush1.xpose.msra.mxu0 0.0
    %845 = vmatprep.subr.mxu0 0.0
    %846 = vmatpush1.xpose.msra.mxu0 0.0
    %847 = vmatprep.subr.mxu0 0.0
    %848 = vmatpush1.xpose.msra.mxu0 0.0
    %849 = vmatprep.subr.mxu0 0.0
    %850 = vmatpush1.xpose.msra.mxu0 0.0
    %851 = vmatprep.subr.mxu0 0.0
    %v852 = vand.u32 %v47, 4294901760
    %v853 = vsub.f32 %v47, %v852
    %v854 = vand.u32 %v853, 4294901760
    %855 = vmatpush1.xpose.msra.mxu0 %v854
    %856 = vmatprep.subr.mxu0 0.0
    %857 = vmatpush2.xpose.msra.mxu0 0.0
    %858 = vmatprep.subr.mxu0 0.0
    %859 = vmatpush2.xpose.msra.mxu0 0.0
    %860 = vmatprep.subr.mxu0 0.0
    %861 = vmatpush2.xpose.msra.mxu0 0.0
    %862 = vmatprep.subr.mxu0 0.0
    %863 = vmatpush2.xpose.msra.mxu0 0.0
    %864 = vmatprep.subr.mxu0 0.0
    %865 = vmatpush2.xpose.msra.mxu0 0.0
    %866 = vmatprep.subr.mxu0 0.0
    %867 = vmatpush2.xpose.msra.mxu0 0.0
    %868 = vmatprep.subr.mxu0 0.0
    %869 = vmatpush2.xpose.msra.mxu0 0.0
    %870 = vmatprep.subr.mxu0 0.0
    %871 = vmatpush2.xpose.msra.mxu0 0.0
    %872 = vmatprep.subr.mxu0 0.0
    %873 = vmatpush2.xpose.msra.mxu0 0.0
    %874 = vmatprep.subr.mxu0 0.0
    %875 = vmatpush2.xpose.msra.mxu0 0.0
    %876 = vmatprep.subr.mxu0 0.0
    %877 = vmatpush2.xpose.msra.mxu0 0.0
    %878 = vmatprep.subr.mxu0 0.0
    %879 = vmatpush2.xpose.msra.mxu0 0.0
    %880 = vmatprep.subr.mxu0 0.0
    %881 = vmatpush2.xpose.msra.mxu0 0.0
    %882 = vmatprep.subr.mxu0 0.0
    %883 = vmatpush2.xpose.msra.mxu0 0.0
    %884 = vmatprep.subr.mxu0 0.0
    %885 = vmatpush2.xpose.msra.mxu0 0.0
    %886 = vmatprep.subr.mxu0 0.0
    %887 = vmatpush2.xpose.msra.mxu0 0.0
    %888 = vmatprep.mubr.f32.mxu0 0.0
    %v889 = vand.u32 %v44, 4294901760
    %890 = vmatmul.mubr.f32.gmra.mxu0 %v889
    %v891 = vpop.f32.mrf.mxu0
    %v892 = vadd.f32 %v818, %v891
    %v893 = vpop.f32.mrf.mxu0
    %894 = vdwg.mxu0
    %895 = vmatprep.subr.mxu0 0.0
    %896 = vmatpush1.xpose.msra.mxu0 0.0
    %897 = vmatprep.subr.mxu0 0.0
    %898 = vmatpush1.xpose.msra.mxu0 0.0
    %899 = vmatprep.subr.mxu0 0.0
    %900 = vmatpush1.xpose.msra.mxu0 0.0
    %901 = vmatprep.subr.mxu0 0.0
    %902 = vmatpush1.xpose.msra.mxu0 0.0
    %903 = vmatprep.subr.mxu0 0.0
    %904 = vmatpush1.xpose.msra.mxu0 0.0
    %905 = vmatprep.subr.mxu0 0.0
    %906 = vmatpush1.xpose.msra.mxu0 0.0
    %907 = vmatprep.subr.mxu0 0.0
    %908 = vmatpush1.xpose.msra.mxu0 0.0
    %909 = vmatprep.subr.mxu0 0.0
    %910 = vmatpush1.xpose.msra.mxu0 0.0
    %911 = vmatprep.subr.mxu0 0.0
    %912 = vmatpush1.xpose.msra.mxu0 0.0
    %913 = vmatprep.subr.mxu0 0.0
    %914 = vmatpush1.xpose.msra.mxu0 0.0
    %915 = vmatprep.subr.mxu0 0.0
    %916 = vmatpush1.xpose.msra.mxu0 0.0
    %917 = vmatprep.subr.mxu0 0.0
    %918 = vmatpush1.xpose.msra.mxu0 0.0
    %919 = vmatprep.subr.mxu0 0.0
    %920 = vmatpush1.xpose.msra.mxu0 0.0
    %921 = vmatprep.subr.mxu0 0.0
    %922 = vmatpush1.xpose.msra.mxu0 0.0
    %923 = vmatprep.subr.mxu0 0.0
    %924 = vmatpush1.xpose.msra.mxu0 0.0
    %925 = vmatprep.subr.mxu0 0.0
    %v926 = vand.u32 %v47, 4294901760
    %927 = vmatpush1.xpose.msra.mxu0 %v926
    %928 = vmatprep.subr.mxu0 0.0
    %929 = vmatpush2.xpose.msra.mxu0 0.0
    %930 = vmatprep.subr.mxu0 0.0
    %931 = vmatpush2.xpose.msra.mxu0 0.0
    %932 = vmatprep.subr.mxu0 0.0
    %933 = vmatpush2.xpose.msra.mxu0 0.0
    %934 = vmatprep.subr.mxu0 0.0
    %935 = vmatpush2.xpose.msra.mxu0 0.0
    %936 = vmatprep.subr.mxu0 0.0
    %937 = vmatpush2.xpose.msra.mxu0 0.0
    %938 = vmatprep.subr.mxu0 0.0
    %939 = vmatpush2.xpose.msra.mxu0 0.0
    %940 = vmatprep.subr.mxu0 0.0
    %941 = vmatpush2.xpose.msra.mxu0 0.0
    %942 = vmatprep.subr.mxu0 0.0
    %943 = vmatpush2.xpose.msra.mxu0 0.0
    %944 = vmatprep.subr.mxu0 0.0
    %945 = vmatpush2.xpose.msra.mxu0 0.0
    %946 = vmatprep.subr.mxu0 0.0
    %947 = vmatpush2.xpose.msra.mxu0 0.0
    %948 = vmatprep.subr.mxu0 0.0
    %949 = vmatpush2.xpose.msra.mxu0 0.0
    %950 = vmatprep.subr.mxu0 0.0
    %951 = vmatpush2.xpose.msra.mxu0 0.0
    %952 = vmatprep.subr.mxu0 0.0
    %953 = vmatpush2.xpose.msra.mxu0 0.0
    %954 = vmatprep.subr.mxu0 0.0
    %955 = vmatpush2.xpose.msra.mxu0 0.0
    %956 = vmatprep.subr.mxu0 0.0
    %957 = vmatpush2.xpose.msra.mxu0 0.0
    %958 = vmatprep.subr.mxu0 0.0
    %959 = vmatpush2.xpose.msra.mxu0 0.0
    %960 = vmatprep.mubr.f32.mxu0 0.0
    %v961 = vand.u32 %v44, 4294901760
    %962 = vmatmul.mubr.f32.gmra.mxu0 %v961
    %v963 = vpop.f32.mrf.mxu0
    %v964 = vadd.f32 %v892, %v963
    %v965 = vpop.f32.mrf.mxu0
    %966 = vdwg.mxu0
    %vm967 = vcmask 60416
    %v968 = vsel %vm967, %v964, -inf
    %v969 = vrot.slane %v968, 4
    %v970 = vmax.f32 %v968, %v969
    %v971 = vrot.slane %v970, 2
    %v972 = vmax.f32 %v970, %v971
    %v973 = vrot.slane %v972, 1
    %v974 = vmax.f32 %v972, %v973
    %v975 = vsub.f32 %v964, %v974
    %v976 = vmul.f32 %v975, 1.442695
    %v977 = vpow.pop %v976
    %v978 = vsel %vm967, %v977, 0.0
    %v979 = vrot.slane %v978, 4
    %v980 = vadd.f32 %v978, %v979
    %v981 = vrot.slane %v980, 2
    %v982 = vadd.f32 %v980, %v981
    %v983 = vrot.slane %v982, 1
    %v984 = vadd.f32 %v982, %v983
    %v985 = vrcp.pop %v984
    %v986 = vmul.f32 %v977, %v985
    %987 = vst.msk [vmem:[#allocation7] sm:$0xf] %vm967, %v986
    // Predicated region
    $region18: #{tpu_custom_call.1} parent=1 // pred_check
      _
    $region19: #{tpu_custom_call.1} parent=1 // pred_check_branch
      %989 = sbr.rel (0) target = $region21
    $region20: #{tpu_custom_call.1} parent=1 // pred_region
      %s991 = ssub.s32 64, 64
      %992 = vsyncadd [#allocation4], %s991
      %s994 = sshll.u32 [#allocation7], 4
      %s995 = int_to_ptr.vmem [resolvable:$true] %s994
      %997 = dma.vmem_to_hbm [thread:$0]  %s995, 64, %s2, [#allocation4]
    $region21: #{tpu_custom_call.1} parent=1 // pred_fallthru
      _
    // Predicated region
    $region22: #{tpu_custom_call.1} parent=1 // pred_check
      _
    $region23: #{tpu_custom_call.1} parent=1 // pred_check_branch
      %999 = sbr.rel (0) target = $region25
    $region24: #{tpu_custom_call.1} parent=1 // pred_region
      %1000 = dma.done [#allocation4], 64
    $region25: #{tpu_custom_call.1} parent=1 // pred_fallthru
      _
    %1001 = vsyncpa [#allocation3], 1
    %1002 = vsyncpa [#allocation6], 1
    %1003 = vsyncpa [#allocation4], 1

</llo_original>
